<compile_context>
chip_gen: v7x
topology: tpu7x:2x2x1
jax: 0.10.0
libtpu: 0.0.40
codegen_flags: <defaults>
</compile_context>

<pallas_src>
import jax
import jax.numpy as jnp
from jax.experimental import pallas as pl
from jax.experimental.pallas import tpu as pltpu


def _round_up(x, m):
    return ((x + m - 1) // m) * m


def _find_tile(extent, cap, align):
    """Largest tile <= cap that is a multiple of `align`, preferring exact
    divisors of `extent` (so no padding is needed)."""
    cap = max(align, cap - cap % align)
    t = cap
    while t >= align:
        if extent % t == 0:
            return t
        t -= align
    return cap  # no divisor found -> caller pads


def _vmem_capacity_bytes():
    try:
        return int(pltpu.get_tpu_info().vmem_capacity_bytes)
    except Exception:
        return 64 << 20  # conservative default (v7x per-TensorCore VMEM)


def _working_set(tm, tk, tn, in_bytes, out_bytes, multi_k):
    # double-buffered x, w, bias tiles + double-buffered output tile (+ acc)
    ws = 2 * in_bytes * (tm * tk + tk * tn + tn) + 2 * out_bytes * tm * tn
    if multi_k:
        ws += 4 * tm * tn
    return ws


# --------------------------------------------------------------------------
# Kernels
# --------------------------------------------------------------------------
def _span_mlp_kernel_single_k(x_ref, w_ref, b_ref, o_ref):
    # x_ref: (tm, D), w_ref: (D, tn), b_ref: (1, tn), o_ref: (tm, tn)
    acc = jnp.dot(x_ref[...], w_ref[...], preferred_element_type=jnp.float32)
    acc = acc + b_ref[...].astype(jnp.float32)
    o_ref[...] = jnp.maximum(acc, 0.0).astype(o_ref.dtype)


def _span_mlp_kernel_multi_k(x_ref, w_ref, b_ref, o_ref, acc_ref):
    # x_ref: (tm, tk), w_ref: (tk, tn), b_ref: (1, tn), o_ref/acc_ref: (tm, tn)
    k = pl.program_id(2)

    @pl.when(k == 0)
    def _():
        # Fold the bias into the accumulator init (no separate epilogue add).
        acc_ref[...] = jnp.broadcast_to(
            b_ref[...].astype(jnp.float32), acc_ref.shape)

    acc_ref[...] += jnp.dot(x_ref[...], w_ref[...],
                            preferred_element_type=jnp.float32)

    @pl.when(k == pl.num_programs(2) - 1)
    def _():
        o_ref[...] = jnp.maximum(acc_ref[...], 0.0).astype(o_ref.dtype)


# --------------------------------------------------------------------------
# Wrapper
# --------------------------------------------------------------------------
def span_mlp(h, weight, bias, max_width):
    """h: [B, L, D]; weight: [D, D*max_width]; bias: [D*max_width].

    Returns span_rep: [B, L, max_width, D] = relu(h @ W + b).view(B, L, -1, D),
    matching torch's SpanMLP.forward.
    """
    B, L, D = h.shape
    N = D * max_width
    M = B * L
    assert weight.shape == (D, N)
    assert bias.shape == (N,)

    in_bytes = jnp.dtype(h.dtype).itemsize
    out_bytes = in_bytes
    row_align = {4: 8, 2: 16, 1: 32}.get(in_bytes, 8)

    vmem_cap = _vmem_capacity_bytes()
    big_vmem = vmem_cap >= (100 << 20)           # v5e / v6e have 128 MiB
    tm_cap = 512
    tk_cap = 2048
    tn_cap = 2048 if big_vmem else 1024
    tile_budget = (80 << 20) if big_vmem else (40 << 20)
    limit_cap = (96 << 20) if big_vmem else (48 << 20)

    # ---- tile selection (prefer full extents / exact divisors: no padding) --
    tm = M if M <= tm_cap else _find_tile(M, tm_cap, row_align)
    tk = D if D <= tk_cap else _find_tile(D, tk_cap, 256)
    tn = N if N <= tn_cap else _find_tile(N, tn_cap, 128)
    multi_k = tk < D

    # Shrink tn if the double-buffered working set would blow the VMEM budget.
    while (_working_set(tm, tk, tn, in_bytes, out_bytes, multi_k) > tile_budget
           and tn > 128 and tn % 256 == 0):
        tn //= 2

    Mp = _round_up(M, tm)
    Np = _round_up(N, tn)
    # v7x megacore: give the parallel (i, j) grid an even tile count when cheap.
    if ((Mp // tm) * (Np // tn)) % 2 == 1 and tn >= 256 and tn % 256 == 0:
        tn //= 2
        Np = _round_up(N, tn)
    Kp = _round_up(D, tk)

    # ---- pad only when a dimension is genuinely not coverable --------------
    x = h.reshape(M, D)
    if (Mp, Kp) != (M, D):
        x = jnp.pad(x, ((0, Mp - M), (0, Kp - D)))
    w = weight
    if (Kp, Np) != (D, N):
        w = jnp.pad(w, ((0, Kp - D), (0, Np - N)))
    b2 = bias.reshape(1, N)
    if Np != N:
        b2 = jnp.pad(b2, ((0, 0), (0, Np - N)))

    # ---- grid / specs -------------------------------------------------------
    if multi_k:
        grid = (Mp // tm, Np // tn, Kp // tk)
        in_specs = [
            pl.BlockSpec((tm, tk), lambda i, j, k: (i, k)),   # activations
            pl.BlockSpec((tk, tn), lambda i, j, k: (k, j)),   # weight
            pl.BlockSpec((1, tn), lambda i, j, k: (0, j)),    # bias
        ]
        out_specs = pl.BlockSpec((tm, tn), lambda i, j, k: (i, j))
        scratch = [pltpu.VMEM((tm, tn), jnp.float32)]
        kernel = _span_mlp_kernel_multi_k
        dims = ("parallel", "parallel", "arbitrary")
    else:
        grid = (Mp // tm, Np // tn)
        in_specs = [
            pl.BlockSpec((tm, tk), lambda i, j: (i, 0)),      # constant over j
            pl.BlockSpec((tk, tn), lambda i, j: (0, j)),
            pl.BlockSpec((1, tn), lambda i, j: (0, j)),
        ]
        out_specs = pl.BlockSpec((tm, tn), lambda i, j: (i, j))
        scratch = []
        kernel = _span_mlp_kernel_single_k
        dims = ("parallel", "parallel")

    ws = _working_set(tm, tk, tn, in_bytes, out_bytes, multi_k)
    vmem_limit = int(min(limit_cap, max(2 * ws + (4 << 20), 8 << 20)))

    cost = pl.CostEstimate(
        flops=2 * Mp * Np * Kp,
        bytes_accessed=in_bytes * (Mp * Kp + Kp * Np + Np) + out_bytes * Mp * Np,
        transcendentals=0,
    )

    out = pl.pallas_call(
        kernel,
        out_shape=jax.ShapeDtypeStruct((Mp, Np), h.dtype),
        grid_spec=pltpu.PrefetchScalarGridSpec(
            num_scalar_prefetch=0,
            grid=grid,
            in_specs=in_specs,
            out_specs=out_specs,
            scratch_shapes=scratch,
        ),
        compiler_params=pltpu.CompilerParams(
            dimension_semantics=dims,
            vmem_limit_bytes=vmem_limit,
        ),
        cost_estimate=cost,
    )(x, w, b2)

    if (Mp, Np) != (M, N):
        out = out[:M, :N]
    # torch's .view(B, L, -1, D): feature axis splits into (max_width, D), D innermost.
    return out.reshape(B, L, max_width, D)


def _ref(h, weight, bias, max_width):
    B, L, D = h.shape
    y = jnp.maximum(h.reshape(B * L, D) @ weight + bias, 0.0)
    return y.reshape(B, L, max_width, D)


if __name__ == "__main__":
    # --- case 1: small shapes consistent with the module's forward ----------
    B, L, D = 2, 8, 32
    max_width = 4
    kh, kw, kb = jax.random.split(jax.random.PRNGKey(0), 3)

    h = jax.random.normal(kh, (B, L, D), dtype=jnp.float32)
    bound = 1.0 / jnp.sqrt(jnp.float32(D))
    # weight stored as [in_features, out_features] so the kernel does x @ W
    # directly (equivalent to torch's x @ weight.T with weight [out, in]).
    weight = jax.random.uniform(kw, (D, D * max_width), dtype=jnp.float32,
                                minval=-bound, maxval=bound)
    bias = jax.random.uniform(kb, (D * max_width,), dtype=jnp.float32,
                              minval=-bound, maxval=bound)

    span_rep = jax.block_until_ready(span_mlp(h, weight, bias, max_width))
    assert span_rep.shape == (B, L, max_width, D)
    assert jnp.allclose(span_rep, _ref(h, weight, bias, max_width),
                        atol=1e-5, rtol=1e-5)

    # --- case 2: unaligned shapes to exercise the full-extent tile path -----
    B2, L2, D2, mw2 = 2, 10, 48, 3
    k2h, k2w, k2b = jax.random.split(jax.random.PRNGKey(1), 3)
    h2 = jax.random.normal(k2h, (B2, L2, D2), dtype=jnp.float32)
    b2_ = 1.0 / jnp.sqrt(jnp.float32(D2))
    w2 = jax.random.uniform(k2w, (D2, D2 * mw2), dtype=jnp.float32,
                            minval=-b2_, maxval=b2_)
    bias2 = jax.random.uniform(k2b, (D2 * mw2,), dtype=jnp.float32,
                               minval=-b2_, maxval=b2_)
    out2 = jax.block_until_ready(span_mlp(h2, w2, bias2, mw2))
    assert out2.shape == (B2, L2, mw2, D2)
    assert jnp.allclose(out2, _ref(h2, w2, bias2, mw2), atol=1e-5, rtol=1e-5)

    print("KERNEL_OK")
</pallas_src>

<mosaic_0001>
module attributes {stable_mosaic.version = 11 : i64} {
  func.func @_span_mlp_kernel_single_k(%arg0: i32, %arg1: i32, %arg2: memref<16x32xf32, #tpu.memory_space<vmem>>, %arg3: memref<32x128xf32, #tpu.memory_space<vmem>>, %arg4: memref<1x128xf32, #tpu.memory_space<vmem>>, %arg5: memref<16x128xf32, #tpu.memory_space<vmem>>) attributes {dimension_semantics = [#tpu.dimension_semantics<parallel>, #tpu.dimension_semantics<parallel>], iteration_bounds = array<i64: 1, 1>, scalar_prefetch = 0 : i64, scratch_operands = 0 : i64, tpu.core_type = #tpu.core_type<tc>, window_params = [{transform_indices = @transform_0, window_bounds = array<i64: 16, 32>}, {transform_indices = @transform_1, window_bounds = array<i64: 32, 128>}, {transform_indices = @transform_2, window_bounds = array<i64: 1, 128>}, {transform_indices = @transform_3, window_bounds = array<i64: 16, 128>}]} {
    %c0 = arith.constant 0 : index
    %c0_0 = arith.constant 0 : index
    %0 = vector.load %arg2[%c0, %c0_0] : memref<16x32xf32, #tpu.memory_space<vmem>>, vector<16x32xf32>
    %c0_1 = arith.constant 0 : index
    %c0_2 = arith.constant 0 : index
    %1 = vector.load %arg3[%c0_1, %c0_2] : memref<32x128xf32, #tpu.memory_space<vmem>>, vector<32x128xf32>
    %cst = arith.constant dense<0.000000e+00> : vector<16x128xf32>
    %2 = tpu.matmul %0, %1, %cst {dimension_numbers = #tpu.dot_dimension_numbers<[1], [0], [0], [1], [0, 0, 1, 1], [], []>} : vector<16x32xf32>, vector<32x128xf32>, vector<16x128xf32> -> vector<16x128xf32>
    %c0_3 = arith.constant 0 : index
    %c0_4 = arith.constant 0 : index
    %3 = vector.load %arg4[%c0_3, %c0_4] : memref<1x128xf32, #tpu.memory_space<vmem>>, vector<1x128xf32>
    %4 = vector.broadcast %3 : vector<1x128xf32> to vector<16x128xf32>
    %5 = arith.addf %2, %4 : vector<16x128xf32>
    %cst_5 = arith.constant 0.000000e+00 : f32
    %6 = vector.broadcast %cst_5 : f32 to vector<16x128xf32>
    %7 = arith.maximumf %5, %6 : vector<16x128xf32>
    %c0_6 = arith.constant 0 : index
    %c0_7 = arith.constant 0 : index
    %8 = vector.load %arg5[%c0_6, %c0_7] : memref<16x128xf32, #tpu.memory_space<vmem>>, vector<16x128xf32>
    tpu.vector_store %arg5[%c0_6, %c0_7], %7 {strides = array<i32>} : memref<16x128xf32, #tpu.memory_space<vmem>>, vector<16x128xf32>,
    return
  }
  func.func @transform_0(%arg0: i32, %arg1: i32) -> (i32, i32) {
    %c0_i32 = arith.constant 0 : i32
    %c0_i32_0 = arith.constant 0 : i32
    return %arg0, %c0_i32 : i32, i32
  }
  func.func @transform_1(%arg0: i32, %arg1: i32) -> (i32, i32) {
    %c0_i32 = arith.constant 0 : i32
    %c0_i32_0 = arith.constant 0 : i32
    return %c0_i32, %arg1 : i32, i32
  }
  func.func @transform_2(%arg0: i32, %arg1: i32) -> (i32, i32) {
    %c0_i32 = arith.constant 0 : i32
    %c0_i32_0 = arith.constant 0 : i32
    return %c0_i32, %arg1 : i32, i32
  }
  func.func @transform_3(%arg0: i32, %arg1: i32) -> (i32, i32) {
    %c0_i32 = arith.constant 0 : i32
    return %arg0, %arg1 : i32, i32
  }
}

</mosaic_0001>

<llo_original>
// kernel: tpu_custom_call.1
$region0: #{tpu_custom_call.1}
  #allocation0 [shape = 'u32[]', space=smem, size = 0x4, offset = 0x4, fixed_abs, tag = 'smem constant byte address 0x4 - core index']
  #allocation1 [shape = 'u32[144,128]{1,0:T(1,128)}', space=vmem, size = 0x12000, scoped, tag = 'internal scratch']
  %s0 = inlined_call_operand.hbm [shape: f32[16,32], index: 0, kind: input, shape index: {}]
  %s1 = inlined_call_operand.hbm [shape: f32[32,128], index: 1, kind: input, shape index: {}]
  %s2 = inlined_call_operand.vmem [shape: f32[1,128], index: 2, kind: input, shape index: {}]
  %s3 = inlined_call_operand.hbm [shape: f32[16,128], index: 3, kind: output, shape index: {}]
  %s4 = sld [smem:[#allocation0]]
  $region30: #{tpu_custom_call.1} parent=0
    _
  %s6 = ssub.s32 1, %s4
  %s7 = scalar_select 0, %s6, %s4
  $region1: #{tpu_custom_call.1} parent=0
    #allocation2 [shape = 'u8[8192]{0}', space=vmem, size = 0x2000, scoped, tag = 'input window, operand 0, single buffered']
    #allocation3 [shape = 's32[1]{0}', space=sflag, size = 0x4, scoped, tag = 'scoped memory for tpu_custom_call.1']
    #allocation4 [shape = 's32[1]{0}', space=sflag, size = 0x4, scoped, tag = 'scoped memory for tpu_custom_call.1']
    #allocation5 [shape = 'u8[16384]{0}', space=vmem, size = 0x4000, scoped, tag = 'input window, operand 1, single buffered']
    #allocation6 [shape = 's32[1]{0}', space=sflag, size = 0x4, scoped, tag = 'scoped memory for tpu_custom_call.1']
    #allocation7 [shape = 'u8[8192]{0}', space=vmem, size = 0x2000, scoped, tag = 'output window, operand 0, single buffered']
    %8 = vsyncpa [#allocation3], 0
    %9 = vsyncpa [#allocation6], 0
    %10 = vsyncpa [#allocation4], 0
    // Predicated region
    $region2: #{tpu_custom_call.1} parent=1 // pred_check
      _
    $region3: #{tpu_custom_call.1} parent=1 // pred_check_branch
      %12 = sbr.rel (0) target = $region5
    $region4: #{tpu_custom_call.1} parent=1 // pred_region
      %s14 = ssub.s32 256, 256
      %15 = vsyncadd [#allocation3], %s14
      %s16 = sshll.u32 [#allocation2], 4
      %s17 = int_to_ptr.vmem [resolvable:$true] %s16
      %22 = dma.hbm_to_vmem [thread:$0]  %s0, 256, %s17, [#allocation3], 128, 128, 8
    $region5: #{tpu_custom_call.1} parent=1 // pred_fallthru
      _
    // Predicated region
    $region6: #{tpu_custom_call.1} parent=1 // pred_check
      _
    $region7: #{tpu_custom_call.1} parent=1 // pred_check_branch
      %24 = sbr.rel (0) target = $region9
    $region8: #{tpu_custom_call.1} parent=1 // pred_region
      %s26 = ssub.s32 512, 512
      %27 = vsyncadd [#allocation6], %s26
      %s28 = sshll.u32 [#allocation5], 4
      %s29 = int_to_ptr.vmem [resolvable:$true] %s28
      %34 = dma.hbm_to_vmem [thread:$0]  %s1, 512, %s29, [#allocation6], 128, 128, 8
    $region9: #{tpu_custom_call.1} parent=1 // pred_fallthru
      _
    // Predicated region
    $region10: #{tpu_custom_call.1} parent=1 // pred_check
      _
    $region11: #{tpu_custom_call.1} parent=1 // pred_check_branch
      %36 = sbr.rel (0) target = $region13
    $region12: #{tpu_custom_call.1} parent=1 // pred_region
      _
    $region13: #{tpu_custom_call.1} parent=1 // pred_fallthru
      _
    // Predicated region
    $region14: #{tpu_custom_call.1} parent=1 // pred_check
      _
    $region15: #{tpu_custom_call.1} parent=1 // pred_check_branch
      %38 = sbr.rel (0) target = $region17
    $region16: #{tpu_custom_call.1} parent=1 // pred_region
      %39 = dma.done [#allocation3], 256
    $region17: #{tpu_custom_call.1} parent=1 // pred_fallthru
      _
    // Predicated region
    $region18: #{tpu_custom_call.1} parent=1 // pred_check
      _
    $region19: #{tpu_custom_call.1} parent=1 // pred_check_branch
      %41 = sbr.rel (0) target = $region21
    $region20: #{tpu_custom_call.1} parent=1 // pred_region
      %42 = dma.done [#allocation6], 512
    $region21: #{tpu_custom_call.1} parent=1 // pred_fallthru
      _
    %v43 = vld [vmem:[#allocation2] sm:$0xff]
    %v44 = vld [vmem:[#allocation2 + $0x8] sm:$0xff]
    %v45 = vld [vmem:[#allocation5] sm:$0xff]
    %v46 = vld [vmem:[#allocation5 + $0x8] sm:$0xff]
    %v47 = vld [vmem:[#allocation5 + $0x10] sm:$0xff]
    %v48 = vld [vmem:[#allocation5 + $0x18] sm:$0xff]
    %v49 = vld [vmem:[%s2] sm:$0x1]
    %v51 = vlaneseq
    %v52 = vshrl.u32 %v51, 7
    %v53 = vsub.s32 0, %v52
    %v54 = vrot.slane %v49, %v53
    %vm56 = vcmask 261120
    %v58 = vsel %vm56, %v43, 0
    %v61 = vsel %vm56, %v44, 0
    %63 = vmatprep.subr.mxu0 0.0
    %64 = vmatpush1.msra.mxu0 %v45
    %65 = vmatprep.subr.mxu0 0.0
    %66 = vmatpush1.msra.mxu0 %v46
    %67 = vmatprep.subr.mxu0 0.0
    %68 = vmatpush1.msra.mxu0 %v47
    %69 = vmatprep.subr.mxu0 0.0
    %70 = vmatpush1.msra.mxu0 %v48
    %71 = vmatprep.subr.mxu0 0.0
    %72 = vmatpush1.msra.mxu0 0.0
    %73 = vmatprep.subr.mxu0 0.0
    %74 = vmatpush1.msra.mxu0 0.0
    %75 = vmatprep.subr.mxu0 0.0
    %76 = vmatpush1.msra.mxu0 0.0
    %77 = vmatprep.subr.mxu0 0.0
    %78 = vmatpush1.msra.mxu0 0.0
    %79 = vmatprep.subr.mxu0 0.0
    %80 = vmatpush1.msra.mxu0 0.0
    %81 = vmatprep.subr.mxu0 0.0
    %82 = vmatpush1.msra.mxu0 0.0
    %83 = vmatprep.subr.mxu0 0.0
    %84 = vmatpush1.msra.mxu0 0.0
    %85 = vmatprep.subr.mxu0 0.0
    %86 = vmatpush1.msra.mxu0 0.0
    %87 = vmatprep.subr.mxu0 0.0
    %88 = vmatpush1.msra.mxu0 0.0
    %89 = vmatprep.subr.mxu0 0.0
    %90 = vmatpush1.msra.mxu0 0.0
    %91 = vmatprep.subr.mxu0 0.0
    %92 = vmatpush1.msra.mxu0 0.0
    %93 = vmatprep.subr.mxu0 0.0
    %94 = vmatpush1.msra.mxu0 0.0
    %95 = vmatprep.subr.mxu0 0.0
    %96 = vmatpush1.msra.mxu0 0.0
    %97 = vmatprep.subr.mxu0 0.0
    %98 = vmatpush1.msra.mxu0 0.0
    %99 = vmatprep.subr.mxu0 0.0
    %100 = vmatpush1.msra.mxu0 0.0
    %101 = vmatprep.subr.mxu0 0.0
    %102 = vmatpush1.msra.mxu0 0.0
    %103 = vmatprep.subr.mxu0 0.0
    %104 = vmatpush1.msra.mxu0 0.0
    %105 = vmatprep.subr.mxu0 0.0
    %106 = vmatpush1.msra.mxu0 0.0
    %107 = vmatprep.subr.mxu0 0.0
    %108 = vmatpush1.msra.mxu0 0.0
    %109 = vmatprep.subr.mxu0 0.0
    %110 = vmatpush1.msra.mxu0 0.0
    %111 = vmatprep.subr.mxu0 0.0
    %112 = vmatpush1.msra.mxu0 0.0
    %113 = vmatprep.subr.mxu0 0.0
    %114 = vmatpush1.msra.mxu0 0.0
    %115 = vmatprep.subr.mxu0 0.0
    %116 = vmatpush1.msra.mxu0 0.0
    %117 = vmatprep.subr.mxu0 0.0
    %118 = vmatpush1.msra.mxu0 0.0
    %119 = vmatprep.subr.mxu0 0.0
    %120 = vmatpush1.msra.mxu0 0.0
    %121 = vmatprep.subr.mxu0 0.0
    %122 = vmatpush1.msra.mxu0 0.0
    %123 = vmatprep.subr.mxu0 0.0
    %124 = vmatpush1.msra.mxu0 0.0
    %125 = vmatprep.subr.mxu0 0.0
    %126 = vmatpush1.msra.mxu0 0.0
    %127 = vmatprep.mubr.f32.mxu0 0.0
    %128 = vmatmul.mubr.f32.gmra.mrb[0].mxu0 %v58
    %v129 = vpop.f32.mrb[0].mxu0
    %v130 = vadd.f32 %v54, %v129
    %v131 = vpop.f32.mrb[0].mxu0
    %132 = vmatprep.mubr.f32.mxu0 0.0
    %133 = vmatmul.mubr.f32.gmra.mrb[0].mxu0 %v61
    %v134 = vpop.f32.mrb[0].mxu0
    %v135 = vadd.f32 %v54, %v134
    %v136 = vpop.f32.mrb[0].mxu0
    %137 = vdwg.mxu0
    %v138 = vmax.f32 %v130, 0.0
    %v139 = vmax.f32 %v135, 0.0
    %140 = vst [vmem:[#allocation7] sm:$0xff] %v138
    %141 = vst [vmem:[#allocation7 + $0x8] sm:$0xff] %v139
    // Predicated region
    $region22: #{tpu_custom_call.1} parent=1 // pred_check
      _
    $region23: #{tpu_custom_call.1} parent=1 // pred_check_branch
      %143 = sbr.rel (0) target = $region25
    $region24: #{tpu_custom_call.1} parent=1 // pred_region
      %s145 = ssub.s32 256, 256
      %146 = vsyncadd [#allocation4], %s145
      %s147 = sshll.u32 [#allocation7], 4
      %s148 = int_to_ptr.vmem [resolvable:$true] %s147
      %153 = dma.vmem_to_hbm [thread:$0]  %s148, 256, %s3, [#allocation4], 128, 128, 8
    $region25: #{tpu_custom_call.1} parent=1 // pred_fallthru
      _
    // Predicated region
    $region26: #{tpu_custom_call.1} parent=1 // pred_check
      _
    $region27: #{tpu_custom_call.1} parent=1 // pred_check_branch
      %155 = sbr.rel (0) target = $region29
    $region28: #{tpu_custom_call.1} parent=1 // pred_region
      %156 = dma.done [#allocation4], 256
    $region29: #{tpu_custom_call.1} parent=1 // pred_fallthru
      _
    %157 = vsyncpa [#allocation3], 1
    %158 = vsyncpa [#allocation6], 1
    %159 = vsyncpa [#allocation4], 1

</llo_original>
